<compile_context>
chip_gen: v7x
topology: tpu7x:2x2x1
jax: 0.10.0
libtpu: 0.0.40
codegen_flags: <defaults>
</compile_context>

<pallas_src>
import jax
import jax.numpy as jnp
from jax import lax
from jax.experimental import pallas as pl
from jax.experimental.pallas import tpu as pltpu

F32 = jnp.float32
BF16 = jnp.bfloat16

TILE_MAX = 512                      # per review: 512 reaches ~85% of HBM roofline
VMEM_LIMIT = 48 * 1024 * 1024       # <= 48 MiB: safe even on v7x (64 MiB physical)


def _round_up(x, m):
    return ((x + m - 1) // m) * m


def _bf(x):
    return x.astype(BF16)


# --------------------------------------------------------------------------
# Kernels
# --------------------------------------------------------------------------
def _precontract_kernel(gx_ref, gy_ref, ev_ref, gxo_ref, gyo_ref, accx, accy):
    """Gx = gradX @ evecs, Gy = gradY @ evecs — each grad matrix streamed from HBM once."""
    j = pl.program_id(1)

    @pl.when(j == 0)
    def _():
        accx[...] = jnp.zeros_like(accx)
        accy[...] = jnp.zeros_like(accy)

    ev = ev_ref[...]                                                    # (tk, K) bf16
    accx[...] += jnp.dot(gx_ref[...], ev, preferred_element_type=F32)
    accy[...] += jnp.dot(gy_ref[...], ev, preferred_element_type=F32)

    @pl.when(j == pl.num_programs(1) - 1)
    def _():
        gxo_ref[...] = accx[...].astype(BF16)
        gyo_ref[...] = accy[...].astype(BF16)


def _first_proj_kernel(v_ref, w_ref, b_ref, evm_ref, proj_ref):
    """Per-tile partial projection of x0 = verts @ W_first + b (x0 never hits HBM)."""
    x0 = jnp.dot(v_ref[...], w_ref[...], preferred_element_type=F32) + b_ref[...]
    proj_ref[...] = lax.dot_general(evm_ref[...], x0.astype(BF16),
                                    (((0,), (0,)), ((), ())),
                                    preferred_element_type=F32)          # (K, C)


def _block_body(x_in, evi, gxr, gyr, spec, wcat, w0a, w0b, w0c, b0, w1, b1):
    """Spectral expansion + spatial-gradient features + per-vertex MLP + residual."""
    c = w0a.shape[1]
    xd = jnp.dot(evi, spec, preferred_element_type=F32)                 # (tm, C)
    gX = jnp.dot(gxr, spec, preferred_element_type=F32)                 # gradX @ x_diffuse
    gY = jnp.dot(gyr, spec, preferred_element_type=F32)
    # complex linear with [A_re | A_im] concatenated into one 256-lane matmul
    gxw = jnp.dot(gX.astype(BF16), wcat, preferred_element_type=F32)
    gyw = jnp.dot(gY.astype(BF16), wcat, preferred_element_type=F32)
    bre = gxw[:, :c] - gyw[:, c:]
    bim = gyw[:, :c] + gxw[:, c:]
    xg = jnp.tanh(gX * bre + gY * bim)
    # MiniMLP on [x_in | x_diffuse | x_grad] without materializing the concat.
    # TODO(synk): dropout inside the MiniMLP is treated as eval-mode identity.
    h = jnp.dot(x_in.astype(BF16), w0a, preferred_element_type=F32)
    h = h + jnp.dot(xd.astype(BF16), w0b, preferred_element_type=F32)
    h = h + jnp.dot(xg.astype(BF16), w0c, preferred_element_type=F32)
    h = jnp.maximum(h + b0, 0.0)
    h = jnp.dot(h.astype(BF16), w1, preferred_element_type=F32) + b1
    return x_in + h


def _block0_kernel(v_ref, fw_ref, fb_ref, spec_ref, gx_ref, gy_ref, ev_ref, evm_ref,
                   wcat_ref, w0a_ref, w0b_ref, w0c_ref, b0_ref, w1_ref, b1_ref,
                   xo_ref, proj_ref):
    """Block 0: re-synthesize x0 from verts (cheap K=8 matmul) so x0 never hits HBM."""
    x_in = jnp.dot(v_ref[...], fw_ref[...], preferred_element_type=F32) + fb_ref[...]
    x_out = _block_body(x_in, ev_ref[...], gx_ref[...], gy_ref[...], spec_ref[...],
                        wcat_ref[...], w0a_ref[...], w0b_ref[...], w0c_ref[...],
                        b0_ref[...], w1_ref[...], b1_ref[...])
    xo_ref[...] = x_out
    proj_ref[...] = lax.dot_general(evm_ref[...], x_out.astype(BF16),
                                    (((0,), (0,)), ((), ())),
                                    preferred_element_type=F32)          # partial (K, C)


def _block_kernel(x_ref, spec_ref, gx_ref, gy_ref, ev_ref, evm_ref,
                  wcat_ref, w0a_ref, w0b_ref, w0c_ref, b0_ref, w1_ref, b1_ref,
                  xo_ref, proj_ref):
    x_out = _block_body(x_ref[...], ev_ref[...], gx_ref[...], gy_ref[...], spec_ref[...],
                        wcat_ref[...], w0a_ref[...], w0b_ref[...], w0c_ref[...],
                        b0_ref[...], w1_ref[...], b1_ref[...])
    xo_ref[...] = x_out
    proj_ref[...] = lax.dot_general(evm_ref[...], x_out.astype(BF16),
                                    (((0,), (0,)), ((), ())),
                                    preferred_element_type=F32)


def _last_linear_proj_kernel(x_ref, w_ref, b_ref, evm_ref, feat_ref, a_ref):
    """feat = x @ W + b and per-tile partial A = (Phi*mass)[rows]^T @ feat in one pass."""
    feat = (jnp.dot(x_ref[...].astype(BF16), w_ref[...], preferred_element_type=F32)
            + b_ref[...])
    feat_ref[...] = feat
    a_ref[...] = lax.dot_general(evm_ref[...], feat.astype(BF16),
                                 (((0,), (0,)), ((), ())),
                                 preferred_element_type=F32)             # partial (K, Cout)


# --------------------------------------------------------------------------
# pallas_call wrappers
# --------------------------------------------------------------------------
def pallas_precontract(gx_bf, gy_bf, evecs_bf, t):
    npad = gx_bf.shape[0]
    k = evecs_bf.shape[1]
    return pl.pallas_call(
        _precontract_kernel,
        grid=(npad // t, npad // t),
        in_specs=[pl.BlockSpec((t, t), lambda i, j: (i, j)),
                  pl.BlockSpec((t, t), lambda i, j: (i, j)),
                  pl.BlockSpec((t, k), lambda i, j: (j, 0))],
        out_specs=(pl.BlockSpec((t, k), lambda i, j: (i, 0)),
                   pl.BlockSpec((t, k), lambda i, j: (i, 0))),
        out_shape=(jax.ShapeDtypeStruct((npad, k), BF16),
                   jax.ShapeDtypeStruct((npad, k), BF16)),
        scratch_shapes=[pltpu.VMEM((t, k), F32), pltpu.VMEM((t, k), F32)],
        compiler_params=pltpu.CompilerParams(
            dimension_semantics=("parallel", "arbitrary"),
            vmem_limit_bytes=VMEM_LIMIT),
    )(gx_bf, gy_bf, evecs_bf)


def pallas_first_proj(verts_bf, w_bf, b, evecs_m, tm):
    npad, cin = verts_bf.shape
    c = w_bf.shape[1]
    k = evecs_m.shape[1]
    nt = npad // tm
    return pl.pallas_call(
        _first_proj_kernel,
        grid=(nt,),
        in_specs=[pl.BlockSpec((tm, cin), lambda i: (i, 0)),
                  pl.BlockSpec((cin, c), lambda i: (0, 0)),
                  pl.BlockSpec((1, c), lambda i: (0, 0)),
                  pl.BlockSpec((tm, k), lambda i: (i, 0))],
        out_specs=pl.BlockSpec((None, k, c), lambda i: (i, 0, 0)),
        out_shape=jax.ShapeDtypeStruct((nt, k, c), F32),
        compiler_params=pltpu.CompilerParams(
            dimension_semantics=("parallel",), vmem_limit_bytes=VMEM_LIMIT),
    )(verts_bf, w_bf, b[None, :], evecs_m)


def _block_weight_specs(c):
    return [pl.BlockSpec((c, 2 * c), lambda i: (0, 0)),   # [A_re | A_im]
            pl.BlockSpec((c, c), lambda i: (0, 0)),        # W0a
            pl.BlockSpec((c, c), lambda i: (0, 0)),        # W0b
            pl.BlockSpec((c, c), lambda i: (0, 0)),        # W0c
            pl.BlockSpec((1, c), lambda i: (0, 0)),        # b0
            pl.BlockSpec((c, c), lambda i: (0, 0)),        # W1
            pl.BlockSpec((1, c), lambda i: (0, 0))]        # b1


def pallas_block0(verts_bf, fw_bf, fb, spec_bf, gx, gy, evecs_bf, evecs_m, blk, tm):
    npad, cin = verts_bf.shape
    c = fw_bf.shape[1]
    k = evecs_bf.shape[1]
    nt = npad // tm
    return pl.pallas_call(
        _block0_kernel,
        grid=(nt,),
        in_specs=[pl.BlockSpec((tm, cin), lambda i: (i, 0)),      # verts rows
                  pl.BlockSpec((cin, c), lambda i: (0, 0)),       # first_W
                  pl.BlockSpec((1, c), lambda i: (0, 0)),         # first_b
                  pl.BlockSpec((k, c), lambda i: (0, 0)),         # spec (bf16)
                  pl.BlockSpec((tm, k), lambda i: (i, 0)),        # Gx rows
                  pl.BlockSpec((tm, k), lambda i: (i, 0)),        # Gy rows
                  pl.BlockSpec((tm, k), lambda i: (i, 0)),        # evecs rows
                  pl.BlockSpec((tm, k), lambda i: (i, 0))]        # evecs*mass rows
                 + _block_weight_specs(c),
        out_specs=(pl.BlockSpec((tm, c), lambda i: (i, 0)),
                   pl.BlockSpec((None, k, c), lambda i: (i, 0, 0))),
        out_shape=(jax.ShapeDtypeStruct((npad, c), F32),
                   jax.ShapeDtypeStruct((nt, k, c), F32)),
        compiler_params=pltpu.CompilerParams(
            dimension_semantics=("parallel",), vmem_limit_bytes=VMEM_LIMIT),
    )(verts_bf, fw_bf, fb[None, :], spec_bf, gx, gy, evecs_bf, evecs_m,
      blk["Wcat"], blk["W0a"], blk["W0b"], blk["W0c"], blk["b0"][None, :],
      blk["W1"], blk["b1"][None, :])


def pallas_block(x, spec_bf, gx, gy, evecs_bf, evecs_m, blk, tm):
    npad, c = x.shape
    k = evecs_bf.shape[1]
    nt = npad // tm
    return pl.pallas_call(
        _block_kernel,
        grid=(nt,),
        in_specs=[pl.BlockSpec((tm, c), lambda i: (i, 0)),        # x rows
                  pl.BlockSpec((k, c), lambda i: (0, 0)),         # spec (bf16)
                  pl.BlockSpec((tm, k), lambda i: (i, 0)),        # Gx rows
                  pl.BlockSpec((tm, k), lambda i: (i, 0)),        # Gy rows
                  pl.BlockSpec((tm, k), lambda i: (i, 0)),        # evecs rows
                  pl.BlockSpec((tm, k), lambda i: (i, 0))]        # evecs*mass rows
                 + _block_weight_specs(c),
        out_specs=(pl.BlockSpec((tm, c), lambda i: (i, 0)),
                   pl.BlockSpec((None, k, c), lambda i: (i, 0, 0))),
        out_shape=(jax.ShapeDtypeStruct((npad, c), F32),
                   jax.ShapeDtypeStruct((nt, k, c), F32)),
        compiler_params=pltpu.CompilerParams(
            dimension_semantics=("parallel",), vmem_limit_bytes=VMEM_LIMIT),
    )(x, spec_bf, gx, gy, evecs_bf, evecs_m,
      blk["Wcat"], blk["W0a"], blk["W0b"], blk["W0c"], blk["b0"][None, :],
      blk["W1"], blk["b1"][None, :])


def pallas_last_linear_proj(x, w_bf, b, evecs_m, tm):
    npad, c = x.shape
    cout = w_bf.shape[1]
    k = evecs_m.shape[1]
    nt = npad // tm
    return pl.pallas_call(
        _last_linear_proj_kernel,
        grid=(nt,),
        in_specs=[pl.BlockSpec((tm, c), lambda i: (i, 0)),
                  pl.BlockSpec((c, cout), lambda i: (0, 0)),
                  pl.BlockSpec((1, cout), lambda i: (0, 0)),
                  pl.BlockSpec((tm, k), lambda i: (i, 0))],
        out_specs=(pl.BlockSpec((tm, cout), lambda i: (i, 0)),
                   pl.BlockSpec((None, k, cout), lambda i: (i, 0, 0))),
        out_shape=(jax.ShapeDtypeStruct((npad, cout), F32),
                   jax.ShapeDtypeStruct((nt, k, cout), F32)),
        compiler_params=pltpu.CompilerParams(
            dimension_semantics=("parallel",), vmem_limit_bytes=VMEM_LIMIT),
    )(x, w_bf, b[None, :], evecs_m)


# --------------------------------------------------------------------------
# Parameter / input preparation
# --------------------------------------------------------------------------
def init_params(key, C_in=3, C_width=128, C_out=128, N_block=4):
    keys = jax.random.split(key, 2 + N_block)

    def lin(k, fi, fo):
        k1, k2 = jax.random.split(k)
        W = jax.random.normal(k1, (fi, fo), F32) / jnp.sqrt(float(fi))
        b = 0.01 * jax.random.normal(k2, (fo,), F32)
        return W, b

    fW, fb = lin(keys[0], C_in, C_width)
    lW, lb = lin(keys[1], C_width, C_out)
    blocks = []
    for i in range(N_block):
        bk = jax.random.split(keys[2 + i], 5)
        time = jax.nn.softplus(0.1 * jax.random.normal(bk[0], (C_width,), F32)) + 1e-8
        A_re = jax.random.normal(bk[1], (C_width, C_width), F32) / jnp.sqrt(float(C_width))
        A_im = jax.random.normal(bk[2], (C_width, C_width), F32) / jnp.sqrt(float(C_width))
        W0, b0 = lin(bk[3], 3 * C_width, C_width)
        W1, b1 = lin(bk[4], C_width, C_width)
        blocks.append(dict(time=time, A_re=A_re, A_im=A_im, W0=W0, b0=b0, W1=W1, b1=b1))
    return dict(first_W=fW, first_b=fb, last_W=lW, last_b=lb, blocks=blocks)


def prepare_params(raw, C_in=3, C_width=128):
    """Pad / split / bf16-cast the raw f32 weights into the kernel-ready layout."""
    cinp = _round_up(C_in, 8)
    first_W = jnp.zeros((cinp, raw["first_W"].shape[1]), F32).at[:C_in].set(raw["first_W"])
    blocks = []
    for blk in raw["blocks"]:
        C = C_width
        blocks.append(dict(
            time=blk["time"],
            Wcat=_bf(jnp.concatenate([blk["A_re"], blk["A_im"]], axis=1)),
            W0a=_bf(blk["W0"][:C]), W0b=_bf(blk["W0"][C:2 * C]), W0c=_bf(blk["W0"][2 * C:]),
            b0=blk["b0"], W1=_bf(blk["W1"]), b1=blk["b1"]))
    return dict(first_W=_bf(first_W), first_b=raw["first_b"],
                last_W=_bf(raw["last_W"]), last_b=raw["last_b"], blocks=blocks)


def prepare_shape(verts, mass, evals, evecs, gradX, gradY, tile_max=TILE_MAX):
    """Zero-pad to tile multiples, fold mass into evecs, pre-contract gradients."""
    n, cin = verts.shape
    k = evals.shape[0]
    npad = _round_up(n, 128)
    tile = 128
    for t in range(tile_max, 127, -128):         # largest 128-multiple dividing npad
        if npad % t == 0:
            tile = t
            break
    kpad = _round_up(k, 8)
    cinp = _round_up(cin, 8)

    verts_p = jnp.zeros((npad, cinp), F32).at[:n, :cin].set(verts)
    mass_p = jnp.zeros((npad, 1), F32).at[:n, 0].set(mass)
    evals_p = jnp.zeros((kpad,), F32).at[:k].set(evals)
    evecs_p = jnp.zeros((npad, kpad), F32).at[:n, :k].set(evecs)
    gX_p = jnp.zeros((npad, npad), F32).at[:n, :n].set(gradX)
    gY_p = jnp.zeros((npad, npad), F32).at[:n, :n].set(gradY)

    evecs_bf = _bf(evecs_p)
    evecs_m = _bf(evecs_p * mass_p)              # mass pre-folded; zero on padded rows
    gX_bf, gY_bf = _bf(gX_p), _bf(gY_p)
    # One-time pre-contraction: each (N,N) gradient matrix is read from HBM exactly once.
    Gx, Gy = pallas_precontract(gX_bf, gY_bf, evecs_bf, tile)

    return dict(n=n, npad=npad, tile=tile, verts=_bf(verts_p), evals=evals_p,
                evecs=evecs_bf, evecs_m=evecs_m, Gx=Gx, Gy=Gy,
                gradX=gX_bf, gradY=gY_bf)        # grads kept only for the reference check


# --------------------------------------------------------------------------
# DiffusionNet feature extractor + functional map forward
# --------------------------------------------------------------------------
def diffusion_net_features(P, S):
    tm = S["tile"]
    # projection of x0 = first_linear(verts) — x0 itself never materializes in HBM
    proj = pallas_first_proj(S["verts"], P["first_W"], P["first_b"],
                             S["evecs_m"], tm).sum(axis=0)
    x = None
    for bi, blk in enumerate(P["blocks"]):
        coefs = jnp.exp(-S["evals"][:, None] * blk["time"][None, :])     # (K, C), tiny
        spec = _bf(coefs * proj)                                          # bf16 once per block
        if bi == 0:
            x, parts = pallas_block0(S["verts"], P["first_W"], P["first_b"], spec,
                                     S["Gx"], S["Gy"], S["evecs"], S["evecs_m"], blk, tm)
        else:
            x, parts = pallas_block(x, spec, S["Gx"], S["Gy"],
                                    S["evecs"], S["evecs_m"], blk, tm)
        proj = parts.sum(axis=0)     # last block's projection is unused (negligible work)
    feat_pad, a_parts = pallas_last_linear_proj(x, P["last_W"], P["last_b"],
                                                S["evecs_m"], tm)
    A_full = a_parts.sum(axis=0)
    return feat_pad[:S["n"], :], A_full


def fmap_forward(P, S1, S2, n_fmap=30, lambda_param=1e-3):
    feat1, A_full = diffusion_net_features(P, S1)
    feat2, B_full = diffusion_net_features(P, S2)
    A = A_full[:n_fmap]                       # Phi_x^T M_x F_x   (k, nf)
    B = B_full[:n_fmap]                       # Phi_y^T M_y F_y   (k, nf)
    ev1 = S1["evals"][:n_fmap]
    ev2 = S2["evals"][:n_fmap]
    aat = A @ A.T
    bat = B @ A.T
    D = (ev1[None, :] - ev2[:, None]) ** 2
    ops = aat[None, :, :] + lambda_param * jax.vmap(jnp.diag)(D)
    # TODO(synk): the batched (30x30) linear solve (torch.inverse) has no clean Pallas
    # primitive; it is done with jnp.linalg.solve on the tiny systems.
    # TODO(synk): the torch forward also computes C_expanded, prints a diff and saves
    # matplotlib heatmaps purely for debugging; the returned C_pred is C_explicit.
    C_rows = jnp.linalg.solve(ops, bat[:, :, None])[..., 0]
    return C_rows[None, :, :], feat1, feat2


# --------------------------------------------------------------------------
# References
# --------------------------------------------------------------------------
def _ref_features(P, S):
    """Pure-JAX reference mirroring the exact bf16/f32 mixed-precision recipe."""
    def dot32(a, b):
        return jnp.dot(a, b, preferred_element_type=F32)

    c = P["first_W"].shape[1]
    Gx = _bf(dot32(S["gradX"], S["evecs"]))
    Gy = _bf(dot32(S["gradY"], S["evecs"]))
    x = dot32(S["verts"], P["first_W"]) + P["first_b"][None, :]
    proj = lax.dot_general(S["evecs_m"], _bf(x), (((0,), (0,)), ((), ())),
                           preferred_element_type=F32)
    for blk in P["blocks"]:
        coefs = jnp.exp(-S["evals"][:, None] * blk["time"][None, :])
        spec = _bf(coefs * proj)
        xd = dot32(S["evecs"], spec)
        gX = dot32(Gx, spec)
        gY = dot32(Gy, spec)
        gxw = dot32(_bf(gX), blk["Wcat"])
        gyw = dot32(_bf(gY), blk["Wcat"])
        bre = gxw[:, :c] - gyw[:, c:]
        bim = gyw[:, :c] + gxw[:, c:]
        xg = jnp.tanh(gX * bre + gY * bim)
        h = (dot32(_bf(x), blk["W0a"]) + dot32(_bf(xd), blk["W0b"])
             + dot32(_bf(xg), blk["W0c"]))
        h = jnp.maximum(h + blk["b0"][None, :], 0.0)
        h = dot32(_bf(h), blk["W1"]) + blk["b1"][None, :]
        x = x + h
        proj = lax.dot_general(S["evecs_m"], _bf(x), (((0,), (0,)), ((), ())),
                               preferred_element_type=F32)
    feat = dot32(_bf(x), P["last_W"]) + P["last_b"][None, :]
    A = lax.dot_general(S["evecs_m"], _bf(feat), (((0,), (0,)), ((), ())),
                        preferred_element_type=F32)
    return feat[:S["n"], :], A


def _ref_forward(P, S1, S2, n_fmap=30, lambda_param=1e-3):
    f1, A_full = _ref_features(P, S1)
    f2, B_full = _ref_features(P, S2)
    A, B = A_full[:n_fmap], B_full[:n_fmap]
    ev1, ev2 = S1["evals"][:n_fmap], S2["evals"][:n_fmap]
    aat, bat = A @ A.T, B @ A.T
    D = (ev1[None, :] - ev2[:, None]) ** 2
    ops = aat[None] + lambda_param * jax.vmap(jnp.diag)(D)
    C = jnp.linalg.solve(ops, bat[:, :, None])[..., 0]
    return C[None], f1, f2


def _ref_features_f32(raw, verts, mass, evals, evecs, gradX, gradY):
    """Full-f32 (torch-math) feature reference — gross-error check only."""
    x = verts @ raw["first_W"] + raw["first_b"][None, :]
    for blk in raw["blocks"]:
        spec = evecs.T @ (mass[:, None] * x)
        spec = jnp.exp(-evals[:, None] * blk["time"][None, :]) * spec
        xd = evecs @ spec
        gX = gradX @ xd
        gY = gradY @ xd
        bre = gX @ blk["A_re"] - gY @ blk["A_im"]
        bim = gY @ blk["A_re"] + gX @ blk["A_im"]
        xg = jnp.tanh(gX * bre + gY * bim)
        cat = jnp.concatenate([x, xd, xg], axis=1)
        h = jnp.maximum(cat @ blk["W0"] + blk["b0"][None, :], 0.0)
        h = h @ blk["W1"] + blk["b1"][None, :]
        x = x + h
    return x @ raw["last_W"] + raw["last_b"][None, :]


# --------------------------------------------------------------------------
if __name__ == "__main__":
    key = jax.random.PRNGKey(0)
    N1, N2, K_eig, n_fmap = 64, 80, 32, 30
    C_in, C_width, C_out, N_block = 3, 128, 128, 4   # module defaults: 'xyz', n_feat=128

    k_par, k_dat = jax.random.split(key)
    raw_params = init_params(k_par, C_in, C_width, C_out, N_block)
    P = prepare_params(raw_params, C_in, C_width)

    def make_shape(k, N):
        ks = jax.random.split(k, 6)
        verts = jax.random.normal(ks[0], (N, C_in), F32)
        mass = jax.random.uniform(ks[1], (N,), F32, 0.5, 1.5)
        evals = jnp.sort(jax.random.uniform(ks[2], (K_eig,), F32, 0.0, 5.0))
        evecs = jax.random.normal(ks[3], (N, K_eig), F32) / jnp.sqrt(float(N))
        gradX = jax.random.normal(ks[4], (N, N), F32) / float(N)
        gradY = jax.random.normal(ks[5], (N, N), F32) / float(N)
        # faces / frames / L / hks / vts of the original 11-tuple are unused for
        # 'xyz' input features with the spectral diffusion method.
        return verts, mass, evals, evecs, gradX, gradY

    k1, k2 = jax.random.split(k_dat)
    raw1 = make_shape(k1, N1)
    raw2 = make_shape(k2, N2)
    S1 = prepare_shape(*raw1)
    S2 = prepare_shape(*raw2)

    C_pred, feat1, feat2 = fmap_forward(P, S1, S2, n_fmap=n_fmap, lambda_param=1e-3)
    jax.block_until_ready((C_pred, feat1, feat2))

    C_ref, f1_ref, f2_ref = _ref_forward(P, S1, S2, n_fmap=n_fmap, lambda_param=1e-3)
    f1_f32 = _ref_features_f32(raw_params, *raw1)
    f2_f32 = _ref_features_f32(raw_params, *raw2)

    def rel_err(a, b):
        return float(jnp.max(jnp.abs(a - b)) / (jnp.max(jnp.abs(b)) + 1e-6))

    assert C_pred.shape == (1, n_fmap, n_fmap)
    assert feat1.shape == (N1, C_out) and feat2.shape == (N2, C_out)
    assert bool(jnp.all(jnp.isfinite(C_pred)))
    # tight check vs the matched-precision reference
    assert rel_err(feat1, f1_ref) < 5e-3 and rel_err(feat2, f2_ref) < 5e-3
    assert rel_err(C_pred, C_ref) < 5e-3
    # loose gross-error check vs full-f32 (torch) math (bf16 streaming operands)
    assert rel_err(feat1, f1_f32) < 1e-1 and rel_err(feat2, f2_f32) < 1e-1
    print("KERNEL_OK")
</pallas_src>

<mosaic_0001>
module attributes {stable_mosaic.version = 11 : i64} {
  func.func @_precontract_kernel(%arg0: i32, %arg1: i32, %arg2: memref<128x128xbf16, #tpu.memory_space<vmem>>, %arg3: memref<128x128xbf16, #tpu.memory_space<vmem>>, %arg4: memref<128x32xbf16, #tpu.memory_space<vmem>>, %arg5: memref<128x32xbf16, #tpu.memory_space<vmem>>, %arg6: memref<128x32xbf16, #tpu.memory_space<vmem>>, %arg7: memref<128x32xf32, #tpu.memory_space<vmem>>, %arg8: memref<128x32xf32, #tpu.memory_space<vmem>>) attributes {dimension_semantics = [#tpu.dimension_semantics<parallel>, #tpu.dimension_semantics<arbitrary>], iteration_bounds = array<i64: 1, 1>, scalar_prefetch = 0 : i64, scratch_operands = 2 : i64, tpu.core_type = #tpu.core_type<tc>, window_params = [{transform_indices = @transform_0, window_bounds = array<i64: 128, 128>}, {transform_indices = @transform_1, window_bounds = array<i64: 128, 128>}, {transform_indices = @transform_2, window_bounds = array<i64: 128, 32>}, {transform_indices = @transform_3, window_bounds = array<i64: 128, 32>}, {transform_indices = @transform_4, window_bounds = array<i64: 128, 32>}]} {
    %c0_i32 = arith.constant 0 : i32
    %0 = arith.cmpi eq, %arg1, %c0_i32 : i32
    %1 = arith.extui %0 : i1 to i32
    %c0_i32_0 = arith.constant 0 : i32
    %2 = arith.cmpi ne, %1, %c0_i32_0 : i32
    scf.if %2 {
      %cst_17 = arith.constant 0.000000e+00 : f32
      %17 = vector.broadcast %cst_17 : f32 to vector<128x32xf32>
      %c0_18 = arith.constant 0 : index
      %c0_19 = arith.constant 0 : index
      %18 = vector.load %arg7[%c0_18, %c0_19] : memref<128x32xf32, #tpu.memory_space<vmem>>, vector<128x32xf32>
      tpu.vector_store %arg7[%c0_18, %c0_19], %17 {strides = array<i32>} : memref<128x32xf32, #tpu.memory_space<vmem>>, vector<128x32xf32>,
      %cst_20 = arith.constant 0.000000e+00 : f32
      %19 = vector.broadcast %cst_20 : f32 to vector<128x32xf32>
      %c0_21 = arith.constant 0 : index
      %c0_22 = arith.constant 0 : index
      %20 = vector.load %arg8[%c0_21, %c0_22] : memref<128x32xf32, #tpu.memory_space<vmem>>, vector<128x32xf32>
      tpu.vector_store %arg8[%c0_21, %c0_22], %19 {strides = array<i32>} : memref<128x32xf32, #tpu.memory_space<vmem>>, vector<128x32xf32>,
    } else {
    }
    %c0 = arith.constant 0 : index
    %c0_1 = arith.constant 0 : index
    %3 = vector.load %arg4[%c0, %c0_1] : memref<128x32xbf16, #tpu.memory_space<vmem>>, vector<128x32xbf16>
    %c0_2 = arith.constant 0 : index
    %c0_3 = arith.constant 0 : index
    %4 = vector.load %arg7[%c0_2, %c0_3] : memref<128x32xf32, #tpu.memory_space<vmem>>, vector<128x32xf32>
    %c0_4 = arith.constant 0 : index
    %c0_5 = arith.constant 0 : index
    %5 = vector.load %arg2[%c0_4, %c0_5] : memref<128x128xbf16, #tpu.memory_space<vmem>>, vector<128x128xbf16>
    %cst = arith.constant dense<0.000000e+00> : vector<128x32xf32>
    %6 = tpu.matmul %5, %3, %cst {dimension_numbers = #tpu.dot_dimension_numbers<[1], [0], [0], [1], [0, 0, 1, 1], [], []>} : vector<128x128xbf16>, vector<128x32xbf16>, vector<128x32xf32> -> vector<128x32xf32>
    %7 = arith.addf %4, %6 : vector<128x32xf32>
    %c0_6 = arith.constant 0 : index
    %c0_7 = arith.constant 0 : index
    %8 = vector.load %arg7[%c0_6, %c0_7] : memref<128x32xf32, #tpu.memory_space<vmem>>, vector<128x32xf32>
    tpu.vector_store %arg7[%c0_6, %c0_7], %7 {strides = array<i32>} : memref<128x32xf32, #tpu.memory_space<vmem>>, vector<128x32xf32>,
    %c0_8 = arith.constant 0 : index
    %c0_9 = arith.constant 0 : index
    %9 = vector.load %arg8[%c0_8, %c0_9] : memref<128x32xf32, #tpu.memory_space<vmem>>, vector<128x32xf32>
    %c0_10 = arith.constant 0 : index
    %c0_11 = arith.constant 0 : index
    %10 = vector.load %arg3[%c0_10, %c0_11] : memref<128x128xbf16, #tpu.memory_space<vmem>>, vector<128x128xbf16>
    %cst_12 = arith.constant dense<0.000000e+00> : vector<128x32xf32>
    %11 = tpu.matmul %10, %3, %cst_12 {dimension_numbers = #tpu.dot_dimension_numbers<[1], [0], [0], [1], [0, 0, 1, 1], [], []>} : vector<128x128xbf16>, vector<128x32xbf16>, vector<128x32xf32> -> vector<128x32xf32>
    %12 = arith.addf %9, %11 : vector<128x32xf32>
    %c0_13 = arith.constant 0 : index
    %c0_14 = arith.constant 0 : index
    %13 = vector.load %arg8[%c0_13, %c0_14] : memref<128x32xf32, #tpu.memory_space<vmem>>, vector<128x32xf32>
    tpu.vector_store %arg8[%c0_13, %c0_14], %12 {strides = array<i32>} : memref<128x32xf32, #tpu.memory_space<vmem>>, vector<128x32xf32>,
    %c0_i32_15 = arith.constant 0 : i32
    %14 = arith.cmpi eq, %arg1, %c0_i32_15 : i32
    %15 = arith.extui %14 : i1 to i32
    %c0_i32_16 = arith.constant 0 : i32
    %16 = arith.cmpi ne, %15, %c0_i32_16 : i32
    scf.if %16 {
      %c0_17 = arith.constant 0 : index
      %c0_18 = arith.constant 0 : index
      %17 = vector.load %arg7[%c0_17, %c0_18] : memref<128x32xf32, #tpu.memory_space<vmem>>, vector<128x32xf32>
      %18 = arith.truncf %17 : vector<128x32xf32> to vector<128x32xbf16>
      %c0_19 = arith.constant 0 : index
      %c0_20 = arith.constant 0 : index
      %19 = vector.load %arg5[%c0_19, %c0_20] : memref<128x32xbf16, #tpu.memory_space<vmem>>, vector<128x32xbf16>
      tpu.vector_store %arg5[%c0_19, %c0_20], %18 {strides = array<i32>} : memref<128x32xbf16, #tpu.memory_space<vmem>>, vector<128x32xbf16>,
      %c0_21 = arith.constant 0 : index
      %c0_22 = arith.constant 0 : index
      %20 = vector.load %arg8[%c0_21, %c0_22] : memref<128x32xf32, #tpu.memory_space<vmem>>, vector<128x32xf32>
      %21 = arith.truncf %20 : vector<128x32xf32> to vector<128x32xbf16>
      %c0_23 = arith.constant 0 : index
      %c0_24 = arith.constant 0 : index
      %22 = vector.load %arg6[%c0_23, %c0_24] : memref<128x32xbf16, #tpu.memory_space<vmem>>, vector<128x32xbf16>
      tpu.vector_store %arg6[%c0_23, %c0_24], %21 {strides = array<i32>} : memref<128x32xbf16, #tpu.memory_space<vmem>>, vector<128x32xbf16>,
    } else {
    }
    return
  }
  func.func @transform_0(%arg0: i32, %arg1: i32) -> (i32, i32) {
    %c0_i32 = arith.constant 0 : i32
    return %arg0, %arg1 : i32, i32
  }
  func.func @transform_1(%arg0: i32, %arg1: i32) -> (i32, i32) {
    %c0_i32 = arith.constant 0 : i32
    return %arg0, %arg1 : i32, i32
  }
  func.func @transform_2(%arg0: i32, %arg1: i32) -> (i32, i32) {
    %c0_i32 = arith.constant 0 : i32
    %c0_i32_0 = arith.constant 0 : i32
    return %arg1, %c0_i32 : i32, i32
  }
  func.func @transform_3(%arg0: i32, %arg1: i32) -> (i32, i32) {
    %c0_i32 = arith.constant 0 : i32
    %c0_i32_0 = arith.constant 0 : i32
    return %arg0, %c0_i32 : i32, i32
  }
  func.func @transform_4(%arg0: i32, %arg1: i32) -> (i32, i32) {
    %c0_i32 = arith.constant 0 : i32
    %c0_i32_0 = arith.constant 0 : i32
    return %arg0, %c0_i32 : i32, i32
  }
}

</mosaic_0001>

<llo_original>
// kernel: tpu_custom_call.1
$region0: #{tpu_custom_call.1}
  #allocation0 [shape = 'u32[]', space=smem, size = 0x4, offset = 0x4, fixed_abs, tag = 'smem constant byte address 0x4 - core index']
  #allocation1 [shape = 'u32[144,128]{1,0:T(1,128)}', space=vmem, size = 0x12000, scoped, tag = 'internal scratch']
  #allocation2 [shape = 'f32[128,32]{1,0:T(8,128)}', space=vmem, size = 0x10000, scoped, tag = 'scratch operand']
  #allocation3 [shape = 'f32[128,32]{1,0:T(8,128)}', space=vmem, size = 0x10000, scoped, tag = 'scratch operand']
  %s0 = inlined_call_operand.vmem [shape: bf16[128,128], index: 0, kind: input, shape index: {}]
  %s1 = inlined_call_operand.hbm [shape: bf16[128,128], index: 1, kind: input, shape index: {}]
  %s2 = inlined_call_operand.vmem [shape: bf16[128,32], index: 2, kind: input, shape index: {}]
  %s3 = inlined_call_operand.vmem [shape: bf16[128,32], index: 3, kind: output, shape index: {0}]
  %s4 = inlined_call_operand.vmem [shape: bf16[128,32], index: 4, kind: output, shape index: {1}]
  %5 = xla_tuple %s3, %s4
  %s6 = sld [smem:[#allocation0]]
  $region42: #{tpu_custom_call.1} parent=0
    _
  %s8 = ssub.s32 1, %s6
  %s9 = scalar_select 0, %s8, %s6
  $region1: #{tpu_custom_call.1} parent=0
    #allocation4 [shape = 'u8[32768]{0}', space=vmem, size = 0x8000, scoped, tag = 'input window, operand 1, single buffered']
    #allocation5 [shape = 's32[1]{0}', space=sflag, size = 0x4, scoped, tag = 'scoped memory for tpu_custom_call.1']
    %10 = vsyncpa [#allocation5], 0
    // Predicated region
    $region2: #{tpu_custom_call.1} parent=1 // pred_check
      _
    $region3: #{tpu_custom_call.1} parent=1 // pred_check_branch
      %12 = sbr.rel (0) target = $region5
    $region4: #{tpu_custom_call.1} parent=1 // pred_region
      _
    $region5: #{tpu_custom_call.1} parent=1 // pred_fallthru
      _
    // Predicated region
    $region6: #{tpu_custom_call.1} parent=1 // pred_check
      _
    $region7: #{tpu_custom_call.1} parent=1 // pred_check_branch
      %14 = sbr.rel (0) target = $region9
    $region8: #{tpu_custom_call.1} parent=1 // pred_region
      %s16 = ssub.s32 1024, 1024
      %17 = vsyncadd [#allocation5], %s16
      %s18 = sshll.u32 [#allocation4], 4
      %s19 = int_to_ptr.vmem [resolvable:$true] %s18
      %24 = dma.hbm_to_vmem [thread:$0]  %s1, 1024, %s19, [#allocation5], 64, 64, 4
    $region9: #{tpu_custom_call.1} parent=1 // pred_fallthru
      _
    // Predicated region
    $region10: #{tpu_custom_call.1} parent=1 // pred_check
      _
    $region11: #{tpu_custom_call.1} parent=1 // pred_check_branch
      %26 = sbr.rel (0) target = $region13
    $region12: #{tpu_custom_call.1} parent=1 // pred_region
      _
    $region13: #{tpu_custom_call.1} parent=1 // pred_fallthru
      _
    // Predicated region
    $region14: #{tpu_custom_call.1} parent=1 // pred_check
      _
    $region15: #{tpu_custom_call.1} parent=1 // pred_check_branch
      %28 = sbr.rel (0) target = $region17
    $region16: #{tpu_custom_call.1} parent=1 // pred_region
      %29 = dma.done [#allocation5], 1024
    $region17: #{tpu_custom_call.1} parent=1 // pred_fallthru
      _
    %p31 = scmp.eq.s32.totalorder 0, 0
    // Predicated region
    $region18: #{tpu_custom_call.1} parent=1 // pred_check
      %p32 = pneg %p31
    $region19: #{tpu_custom_call.1} parent=1 // pred_check_branch
      %34 = sbr.rel (%p32) target = $region21
    $region20: #{tpu_custom_call.1} parent=1 // pred_region
      %vm35 = vcmask 261120
      %36 = vst.msk [vmem:[#allocation2] sm:$0xff] %vm35, 0.0
      %37 = vst.msk [vmem:[#allocation2 + $0x8] sm:$0xff] %vm35, 0.0
      %38 = vst.msk [vmem:[#allocation2 + $0x10] sm:$0xff] %vm35, 0.0
      %39 = vst.msk [vmem:[#allocation2 + $0x18] sm:$0xff] %vm35, 0.0
      %40 = vst.msk [vmem:[#allocation2 + $0x20] sm:$0xff] %vm35, 0.0
      %41 = vst.msk [vmem:[#allocation2 + $0x28] sm:$0xff] %vm35, 0.0
      %42 = vst.msk [vmem:[#allocation2 + $0x30] sm:$0xff] %vm35, 0.0
      %43 = vst.msk [vmem:[#allocation2 + $0x38] sm:$0xff] %vm35, 0.0
      %44 = vst.msk [vmem:[#allocation2 + $0x40] sm:$0xff] %vm35, 0.0
      %45 = vst.msk [vmem:[#allocation2 + $0x48] sm:$0xff] %vm35, 0.0
      %46 = vst.msk [vmem:[#allocation2 + $0x50] sm:$0xff] %vm35, 0.0
      %47 = vst.msk [vmem:[#allocation2 + $0x58] sm:$0xff] %vm35, 0.0
      %48 = vst.msk [vmem:[#allocation2 + $0x60] sm:$0xff] %vm35, 0.0
      %49 = vst.msk [vmem:[#allocation2 + $0x68] sm:$0xff] %vm35, 0.0
      %50 = vst.msk [vmem:[#allocation2 + $0x70] sm:$0xff] %vm35, 0.0
      %51 = vst.msk [vmem:[#allocation2 + $0x78] sm:$0xff] %vm35, 0.0
      %52 = vst.msk [vmem:[#allocation3] sm:$0xff] %vm35, 0.0
      %53 = vst.msk [vmem:[#allocation3 + $0x8] sm:$0xff] %vm35, 0.0
      %54 = vst.msk [vmem:[#allocation3 + $0x10] sm:$0xff] %vm35, 0.0
      %55 = vst.msk [vmem:[#allocation3 + $0x18] sm:$0xff] %vm35, 0.0
      %56 = vst.msk [vmem:[#allocation3 + $0x20] sm:$0xff] %vm35, 0.0
      %57 = vst.msk [vmem:[#allocation3 + $0x28] sm:$0xff] %vm35, 0.0
      %58 = vst.msk [vmem:[#allocation3 + $0x30] sm:$0xff] %vm35, 0.0
      %59 = vst.msk [vmem:[#allocation3 + $0x38] sm:$0xff] %vm35, 0.0
      %60 = vst.msk [vmem:[#allocation3 + $0x40] sm:$0xff] %vm35, 0.0
      %61 = vst.msk [vmem:[#allocation3 + $0x48] sm:$0xff] %vm35, 0.0
      %62 = vst.msk [vmem:[#allocation3 + $0x50] sm:$0xff] %vm35, 0.0
      %63 = vst.msk [vmem:[#allocation3 + $0x58] sm:$0xff] %vm35, 0.0
      %64 = vst.msk [vmem:[#allocation3 + $0x60] sm:$0xff] %vm35, 0.0
      %65 = vst.msk [vmem:[#allocation3 + $0x68] sm:$0xff] %vm35, 0.0
      %66 = vst.msk [vmem:[#allocation3 + $0x70] sm:$0xff] %vm35, 0.0
      %67 = vst.msk [vmem:[#allocation3 + $0x78] sm:$0xff] %vm35, 0.0
    $region21: #{tpu_custom_call.1} parent=1 // pred_fallthru
      _
    %v68 = vld [vmem:[%s2] sm:$0xf]
    %v69 = vld [vmem:[%s2 + $0x4] sm:$0xf]
    %v70 = vld [vmem:[%s2 + $0x8] sm:$0xf]
    %v71 = vld [vmem:[%s2 + $0xc] sm:$0xf]
    %v72 = vld [vmem:[%s2 + $0x10] sm:$0xf]
    %v73 = vld [vmem:[%s2 + $0x14] sm:$0xf]
    %v74 = vld [vmem:[%s2 + $0x18] sm:$0xf]
    %v75 = vld [vmem:[%s2 + $0x1c] sm:$0xf]
    %v76 = vld [vmem:[%s2 + $0x20] sm:$0xf]
    %v77 = vld [vmem:[%s2 + $0x24] sm:$0xf]
    %v78 = vld [vmem:[%s2 + $0x28] sm:$0xf]
    %v79 = vld [vmem:[%s2 + $0x2c] sm:$0xf]
    %v80 = vld [vmem:[%s2 + $0x30] sm:$0xf]
    %v81 = vld [vmem:[%s2 + $0x34] sm:$0xf]
    %v82 = vld [vmem:[%s2 + $0x38] sm:$0xf]
    %v83 = vld [vmem:[%s2 + $0x3c] sm:$0xf]
    %v84 = vld [vmem:[#allocation2] sm:$0xff]
    %v85 = vld [vmem:[#allocation2 + $0x8] sm:$0xff]
    %v86 = vld [vmem:[#allocation2 + $0x10] sm:$0xff]
    %v87 = vld [vmem:[#allocation2 + $0x18] sm:$0xff]
    %v88 = vld [vmem:[#allocation2 + $0x20] sm:$0xff]
    %v89 = vld [vmem:[#allocation2 + $0x28] sm:$0xff]
    %v90 = vld [vmem:[#allocation2 + $0x30] sm:$0xff]
    %v91 = vld [vmem:[#allocation2 + $0x38] sm:$0xff]
    %v92 = vld [vmem:[#allocation2 + $0x40] sm:$0xff]
    %v93 = vld [vmem:[#allocation2 + $0x48] sm:$0xff]
    %v94 = vld [vmem:[#allocation2 + $0x50] sm:$0xff]
    %v95 = vld [vmem:[#allocation2 + $0x58] sm:$0xff]
    %v96 = vld [vmem:[#allocation2 + $0x60] sm:$0xff]
    %v97 = vld [vmem:[#allocation2 + $0x68] sm:$0xff]
    %v98 = vld [vmem:[#allocation2 + $0x70] sm:$0xff]
    %v99 = vld [vmem:[#allocation2 + $0x78] sm:$0xff]
    %v100 = vld [vmem:[%s0] sm:$0xf]
    %v101 = vld [vmem:[%s0 + $0x4] sm:$0xf]
    %v102 = vld [vmem:[%s0 + $0x8] sm:$0xf]
    %v103 = vld [vmem:[%s0 + $0xc] sm:$0xf]
    %v104 = vld [vmem:[%s0 + $0x10] sm:$0xf]
    %v105 = vld [vmem:[%s0 + $0x14] sm:$0xf]
    %v106 = vld [vmem:[%s0 + $0x18] sm:$0xf]
    %v107 = vld [vmem:[%s0 + $0x1c] sm:$0xf]
    %v108 = vld [vmem:[%s0 + $0x20] sm:$0xf]
    %v109 = vld [vmem:[%s0 + $0x24] sm:$0xf]
    %v110 = vld [vmem:[%s0 + $0x28] sm:$0xf]
    %v111 = vld [vmem:[%s0 + $0x2c] sm:$0xf]
    %v112 = vld [vmem:[%s0 + $0x30] sm:$0xf]
    %v113 = vld [vmem:[%s0 + $0x34] sm:$0xf]
    %v114 = vld [vmem:[%s0 + $0x38] sm:$0xf]
    %v115 = vld [vmem:[%s0 + $0x3c] sm:$0xf]
    %v132 = vunpack.c.l.b16 %v100
    %v133 = vunpack.c.l.b16 %v101
    %v134 = vunpack.c.l.b16 %v102
    %v135 = vunpack.c.l.b16 %v103
    %v136 = vunpack.c.l.b16 %v104
    %v137 = vunpack.c.l.b16 %v105
    %v138 = vunpack.c.l.b16 %v106
    %v139 = vunpack.c.l.b16 %v107
    %v140 = vunpack.c.l.b16 %v108
    %v141 = vunpack.c.l.b16 %v109
    %v142 = vunpack.c.l.b16 %v110
    %v143 = vunpack.c.l.b16 %v111
    %v144 = vunpack.c.l.b16 %v112
    %v145 = vunpack.c.l.b16 %v113
    %v146 = vunpack.c.l.b16 %v114
    %v147 = vunpack.c.l.b16 %v115
    %v148 = vpack.c.b16 %v133, %v132
    %v149 = vpack.c.b16 %v135, %v134
    %v150 = vpack.c.b16 %v137, %v136
    %v151 = vpack.c.b16 %v139, %v138
    %v152 = vpack.c.b16 %v141, %v140
    %v153 = vpack.c.b16 %v143, %v142
    %v154 = vpack.c.b16 %v145, %v144
    %v155 = vpack.c.b16 %v147, %v146
    %v180 = vunpack.c.l.b16 %v68
    %v181 = vunpack.c.l.b16 %v69
    %v182 = vunpack.c.l.b16 %v70
    %v183 = vunpack.c.l.b16 %v71
    %v184 = vunpack.c.l.b16 %v72
    %v185 = vunpack.c.l.b16 %v73
    %v186 = vunpack.c.l.b16 %v74
    %v187 = vunpack.c.l.b16 %v75
    %v188 = vunpack.c.l.b16 %v76
    %v189 = vunpack.c.l.b16 %v77
    %v190 = vunpack.c.l.b16 %v78
    %v191 = vunpack.c.l.b16 %v79
    %v192 = vunpack.c.l.b16 %v80
    %v193 = vunpack.c.l.b16 %v81
    %v194 = vunpack.c.l.b16 %v82
    %v195 = vunpack.c.l.b16 %v83
    %v196 = vpack.c.b16 %v181, %v180
    %v197 = vpack.c.b16 %v183, %v182
    %v198 = vpack.c.b16 %v185, %v184
    %v199 = vpack.c.b16 %v187, %v186
    %v200 = vpack.c.b16 %v189, %v188
    %v201 = vpack.c.b16 %v191, %v190
    %v202 = vpack.c.b16 %v193, %v192
    %v203 = vpack.c.b16 %v195, %v194
    %212 = vmatprep.subr.bf16.mxu0 0
    %213 = vmatpush1.bf16.msra.mxu0 %v196
    %214 = vmatprep.subr.bf16.mxu0 0
    %215 = vmatpush1.bf16.msra.mxu0 %v197
    %216 = vmatprep.subr.bf16.mxu0 0
    %217 = vmatpush1.bf16.msra.mxu0 %v198
    %218 = vmatprep.subr.bf16.mxu0 0
    %219 = vmatpush1.bf16.msra.mxu0 %v199
    %220 = vmatprep.subr.bf16.mxu0 0
    %221 = vmatpush1.bf16.msra.mxu0 %v200
    %222 = vmatprep.subr.bf16.mxu0 0
    %223 = vmatpush1.bf16.msra.mxu0 %v201
    %224 = vmatprep.subr.bf16.mxu0 0
    %225 = vmatpush1.bf16.msra.mxu0 %v202
    %226 = vmatprep.subr.bf16.mxu0 0
    %227 = vmatpush1.bf16.msra.mxu0 %v203
    %228 = vmatprep.subr.bf16.mxu0 0
    %229 = vmatpush1.bf16.msra.mxu0 0
    %230 = vmatprep.subr.bf16.mxu0 0
    %231 = vmatpush1.bf16.msra.mxu0 0
    %232 = vmatprep.subr.bf16.mxu0 0
    %233 = vmatpush1.bf16.msra.mxu0 0
    %234 = vmatprep.subr.bf16.mxu0 0
    %235 = vmatpush1.bf16.msra.mxu0 0
    %236 = vmatprep.subr.bf16.mxu0 0
    %237 = vmatpush1.bf16.msra.mxu0 0
    %238 = vmatprep.subr.bf16.mxu0 0
    %239 = vmatpush1.bf16.msra.mxu0 0
    %240 = vmatprep.subr.bf16.mxu0 0
    %241 = vmatpush1.bf16.msra.mxu0 0
    %242 = vmatprep.subr.bf16.mxu0 0
    %243 = vmatpush1.bf16.msra.mxu0 0
    %244 = vmatprep.mubr.bf16.mxu0 0
    %245 = vmatmul.mubr.bf16.gmra.mrb[0].mxu0 %v148
    %v246 = vpop.f32.mrb[0].mxu0
    %v247 = vadd.f32 0.0, %v246
    %v248 = vpop.f32.mrb[0].mxu0
    %v249 = vpop.f32.mrb[0].mxu0
    %v250 = vadd.f32 0.0, %v249
    %v251 = vpop.f32.mrb[0].mxu0
    %252 = vmatprep.mubr.bf16.mxu0 0
    %253 = vmatmul.mubr.bf16.gmra.mrb[0].mxu0 %v149
    %v254 = vpop.f32.mrb[0].mxu0
    %v255 = vadd.f32 0.0, %v254
    %v256 = vpop.f32.mrb[0].mxu0
    %v257 = vpop.f32.mrb[0].mxu0
    %v258 = vadd.f32 0.0, %v257
    %v259 = vpop.f32.mrb[0].mxu0
    %260 = vmatprep.mubr.bf16.mxu0 0
    %261 = vmatmul.mubr.bf16.gmra.mrb[0].mxu0 %v150
    %v262 = vpop.f32.mrb[0].mxu0
    %v263 = vadd.f32 0.0, %v262
    %v264 = vpop.f32.mrb[0].mxu0
    %v265 = vpop.f32.mrb[0].mxu0
    %v266 = vadd.f32 0.0, %v265
    %v267 = vpop.f32.mrb[0].mxu0
    %268 = vmatprep.mubr.bf16.mxu0 0
    %269 = vmatmul.mubr.bf16.gmra.mrb[0].mxu0 %v151
    %v270 = vpop.f32.mrb[0].mxu0
    %v271 = vadd.f32 0.0, %v270
    %v272 = vpop.f32.mrb[0].mxu0
    %v273 = vpop.f32.mrb[0].mxu0
    %v274 = vadd.f32 0.0, %v273
    %v275 = vpop.f32.mrb[0].mxu0
    %276 = vmatprep.mubr.bf16.mxu0 0
    %277 = vmatmul.mubr.bf16.gmra.mrb[0].mxu0 %v152
    %v278 = vpop.f32.mrb[0].mxu0
    %v279 = vadd.f32 0.0, %v278
    %v280 = vpop.f32.mrb[0].mxu0
    %v281 = vpop.f32.mrb[0].mxu0
    %v282 = vadd.f32 0.0, %v281
    %v283 = vpop.f32.mrb[0].mxu0
    %284 = vmatprep.mubr.bf16.mxu0 0
    %285 = vmatmul.mubr.bf16.gmra.mrb[0].mxu0 %v153
    %v286 = vpop.f32.mrb[0].mxu0
    %v287 = vadd.f32 0.0, %v286
    %v288 = vpop.f32.mrb[0].mxu0
    %v289 = vpop.f32.mrb[0].mxu0
    %v290 = vadd.f32 0.0, %v289
    %v291 = vpop.f32.mrb[0].mxu0
    %292 = vmatprep.mubr.bf16.mxu0 0
    %293 = vmatmul.mubr.bf16.gmra.mrb[0].mxu0 %v154
    %v294 = vpop.f32.mrb[0].mxu0
    %v295 = vadd.f32 0.0, %v294
    %v296 = vpop.f32.mrb[0].mxu0
    %v297 = vpop.f32.mrb[0].mxu0
    %v298 = vadd.f32 0.0, %v297
    %v299 = vpop.f32.mrb[0].mxu0
    %300 = vmatprep.mubr.bf16.mxu0 0
    %301 = vmatmul.mubr.bf16.gmra.mrb[0].mxu0 %v155
    %v302 = vpop.f32.mrb[0].mxu0
    %v303 = vadd.f32 0.0, %v302
    %v304 = vpop.f32.mrb[0].mxu0
    %v305 = vpop.f32.mrb[0].mxu0
    %v306 = vadd.f32 0.0, %v305
    %v307 = vpop.f32.mrb[0].mxu0
    %308 = vdwg.mxu0
    %v309 = vadd.f32 %v84, %v247
    %v310 = vadd.f32 %v85, %v250
    %v311 = vadd.f32 %v86, %v255
    %v312 = vadd.f32 %v87, %v258
    %v313 = vadd.f32 %v88, %v263
    %v314 = vadd.f32 %v89, %v266
    %v315 = vadd.f32 %v90, %v271
    %v316 = vadd.f32 %v91, %v274
    %v317 = vadd.f32 %v92, %v279
    %v318 = vadd.f32 %v93, %v282
    %v319 = vadd.f32 %v94, %v287
    %v320 = vadd.f32 %v95, %v290
    %v321 = vadd.f32 %v96, %v295
    %v322 = vadd.f32 %v97, %v298
    %v323 = vadd.f32 %v98, %v303
    %v324 = vadd.f32 %v99, %v306
    %vm325 = vcmask 261120
    %326 = vst.msk [vmem:[#allocation2] sm:$0xff] %vm325, %v309
    %327 = vst.msk [vmem:[#allocation2 + $0x8] sm:$0xff] %vm325, %v310
    %328 = vst.msk [vmem:[#allocation2 + $0x10] sm:$0xff] %vm325, %v311
    %329 = vst.msk [vmem:[#allocation2 + $0x18] sm:$0xff] %vm325, %v312
    %330 = vst.msk [vmem:[#allocation2 + $0x20] sm:$0xff] %vm325, %v313
    %331 = vst.msk [vmem:[#allocation2 + $0x28] sm:$0xff] %vm325, %v314
    %332 = vst.msk [vmem:[#allocation2 + $0x30] sm:$0xff] %vm325, %v315
    %333 = vst.msk [vmem:[#allocation2 + $0x38] sm:$0xff] %vm325, %v316
    %334 = vst.msk [vmem:[#allocation2 + $0x40] sm:$0xff] %vm325, %v317
    %335 = vst.msk [vmem:[#allocation2 + $0x48] sm:$0xff] %vm325, %v318
    %336 = vst.msk [vmem:[#allocation2 + $0x50] sm:$0xff] %vm325, %v319
    %337 = vst.msk [vmem:[#allocation2 + $0x58] sm:$0xff] %vm325, %v320
    %338 = vst.msk [vmem:[#allocation2 + $0x60] sm:$0xff] %vm325, %v321
    %339 = vst.msk [vmem:[#allocation2 + $0x68] sm:$0xff] %vm325, %v322
    %340 = vst.msk [vmem:[#allocation2 + $0x70] sm:$0xff] %vm325, %v323
    %341 = vst.msk [vmem:[#allocation2 + $0x78] sm:$0xff] %vm325, %v324
    %v342 = vld [vmem:[#allocation3] sm:$0xff]
    %v343 = vld [vmem:[#allocation3 + $0x8] sm:$0xff]
    %v344 = vld [vmem:[#allocation3 + $0x10] sm:$0xff]
    %v345 = vld [vmem:[#allocation3 + $0x18] sm:$0xff]
    %v346 = vld [vmem:[#allocation3 + $0x20] sm:$0xff]
    %v347 = vld [vmem:[#allocation3 + $0x28] sm:$0xff]
    %v348 = vld [vmem:[#allocation3 + $0x30] sm:$0xff]
    %v349 = vld [vmem:[#allocation3 + $0x38] sm:$0xff]
    %v350 = vld [vmem:[#allocation3 + $0x40] sm:$0xff]
    %v351 = vld [vmem:[#allocation3 + $0x48] sm:$0xff]
    %v352 = vld [vmem:[#allocation3 + $0x50] sm:$0xff]
    %v353 = vld [vmem:[#allocation3 + $0x58] sm:$0xff]
    %v354 = vld [vmem:[#allocation3 + $0x60] sm:$0xff]
    %v355 = vld [vmem:[#allocation3 + $0x68] sm:$0xff]
    %v356 = vld [vmem:[#allocation3 + $0x70] sm:$0xff]
    %v357 = vld [vmem:[#allocation3 + $0x78] sm:$0xff]
    %v358 = vld [vmem:[#allocation4] sm:$0xf]
    %v359 = vld [vmem:[#allocation4 + $0x4] sm:$0xf]
    %v360 = vld [vmem:[#allocation4 + $0x8] sm:$0xf]
    %v361 = vld [vmem:[#allocation4 + $0xc] sm:$0xf]
    %v362 = vld [vmem:[#allocation4 + $0x10] sm:$0xf]
    %v363 = vld [vmem:[#allocation4 + $0x14] sm:$0xf]
    %v364 = vld [vmem:[#allocation4 + $0x18] sm:$0xf]
    %v365 = vld [vmem:[#allocation4 + $0x1c] sm:$0xf]
    %v366 = vld [vmem:[#allocation4 + $0x20] sm:$0xf]
    %v367 = vld [vmem:[#allocation4 + $0x24] sm:$0xf]
    %v368 = vld [vmem:[#allocation4 + $0x28] sm:$0xf]
    %v369 = vld [vmem:[#allocation4 + $0x2c] sm:$0xf]
    %v370 = vld [vmem:[#allocation4 + $0x30] sm:$0xf]
    %v371 = vld [vmem:[#allocation4 + $0x34] sm:$0xf]
    %v372 = vld [vmem:[#allocation4 + $0x38] sm:$0xf]
    %v373 = vld [vmem:[#allocation4 + $0x3c] sm:$0xf]
    %v390 = vunpack.c.l.b16 %v358
    %v391 = vunpack.c.l.b16 %v359
    %v392 = vunpack.c.l.b16 %v360
    %v393 = vunpack.c.l.b16 %v361
    %v394 = vunpack.c.l.b16 %v362
    %v395 = vunpack.c.l.b16 %v363
    %v396 = vunpack.c.l.b16 %v364
    %v397 = vunpack.c.l.b16 %v365
    %v398 = vunpack.c.l.b16 %v366
    %v399 = vunpack.c.l.b16 %v367
    %v400 = vunpack.c.l.b16 %v368
    %v401 = vunpack.c.l.b16 %v369
    %v402 = vunpack.c.l.b16 %v370
    %v403 = vunpack.c.l.b16 %v371
    %v404 = vunpack.c.l.b16 %v372
    %v405 = vunpack.c.l.b16 %v373
    %v406 = vpack.c.b16 %v391, %v390
    %v407 = vpack.c.b16 %v393, %v392
    %v408 = vpack.c.b16 %v395, %v394
    %v409 = vpack.c.b16 %v397, %v396
    %v410 = vpack.c.b16 %v399, %v398
    %v411 = vpack.c.b16 %v401, %v400
    %v412 = vpack.c.b16 %v403, %v402
    %v413 = vpack.c.b16 %v405, %v404
    %422 = vmatprep.subr.bf16.mxu0 0
    %423 = vmatpush1.bf16.msra.mxu0 %v196
    %424 = vmatprep.subr.bf16.mxu0 0
    %425 = vmatpush1.bf16.msra.mxu0 %v197
    %426 = vmatprep.subr.bf16.mxu0 0
    %427 = vmatpush1.bf16.msra.mxu0 %v198
    %428 = vmatprep.subr.bf16.mxu0 0
    %429 = vmatpush1.bf16.msra.mxu0 %v199
    %430 = vmatprep.subr.bf16.mxu0 0
    %431 = vmatpush1.bf16.msra.mxu0 %v200
    %432 = vmatprep.subr.bf16.mxu0 0
    %433 = vmatpush1.bf16.msra.mxu0 %v201
    %434 = vmatprep.subr.bf16.mxu0 0
    %435 = vmatpush1.bf16.msra.mxu0 %v202
    %436 = vmatprep.subr.bf16.mxu0 0
    %437 = vmatpush1.bf16.msra.mxu0 %v203
    %438 = vmatprep.subr.bf16.mxu0 0
    %439 = vmatpush1.bf16.msra.mxu0 0
    %440 = vmatprep.subr.bf16.mxu0 0
    %441 = vmatpush1.bf16.msra.mxu0 0
    %442 = vmatprep.subr.bf16.mxu0 0
    %443 = vmatpush1.bf16.msra.mxu0 0
    %444 = vmatprep.subr.bf16.mxu0 0
    %445 = vmatpush1.bf16.msra.mxu0 0
    %446 = vmatprep.subr.bf16.mxu0 0
    %447 = vmatpush1.bf16.msra.mxu0 0
    %448 = vmatprep.subr.bf16.mxu0 0
    %449 = vmatpush1.bf16.msra.mxu0 0
    %450 = vmatprep.subr.bf16.mxu0 0
    %451 = vmatpush1.bf16.msra.mxu0 0
    %452 = vmatprep.subr.bf16.mxu0 0
    %453 = vmatpush1.bf16.msra.mxu0 0
    %454 = vmatprep.mubr.bf16.mxu0 0
    %455 = vmatmul.mubr.bf16.gmra.mrb[0].mxu0 %v406
    %v456 = vpop.f32.mrb[0].mxu0
    %v457 = vadd.f32 0.0, %v456
    %v458 = vpop.f32.mrb[0].mxu0
    %v459 = vpop.f32.mrb[0].mxu0
    %v460 = vadd.f32 0.0, %v459
    %v461 = vpop.f32.mrb[0].mxu0
    %462 = vmatprep.mubr.bf16.mxu0 0
    %463 = vmatmul.mubr.bf16.gmra.mrb[0].mxu0 %v407
    %v464 = vpop.f32.mrb[0].mxu0
    %v465 = vadd.f32 0.0, %v464
    %v466 = vpop.f32.mrb[0].mxu0
    %v467 = vpop.f32.mrb[0].mxu0
    %v468 = vadd.f32 0.0, %v467
    %v469 = vpop.f32.mrb[0].mxu0
    %470 = vmatprep.mubr.bf16.mxu0 0
    %471 = vmatmul.mubr.bf16.gmra.mrb[0].mxu0 %v408
    %v472 = vpop.f32.mrb[0].mxu0
    %v473 = vadd.f32 0.0, %v472
    %v474 = vpop.f32.mrb[0].mxu0
    %v475 = vpop.f32.mrb[0].mxu0
    %v476 = vadd.f32 0.0, %v475
    %v477 = vpop.f32.mrb[0].mxu0
    %478 = vmatprep.mubr.bf16.mxu0 0
    %479 = vmatmul.mubr.bf16.gmra.mrb[0].mxu0 %v409
    %v480 = vpop.f32.mrb[0].mxu0
    %v481 = vadd.f32 0.0, %v480
    %v482 = vpop.f32.mrb[0].mxu0
    %v483 = vpop.f32.mrb[0].mxu0
    %v484 = vadd.f32 0.0, %v483
    %v485 = vpop.f32.mrb[0].mxu0
    %486 = vmatprep.mubr.bf16.mxu0 0
    %487 = vmatmul.mubr.bf16.gmra.mrb[0].mxu0 %v410
    %v488 = vpop.f32.mrb[0].mxu0
    %v489 = vadd.f32 0.0, %v488
    %v490 = vpop.f32.mrb[0].mxu0
    %v491 = vpop.f32.mrb[0].mxu0
    %v492 = vadd.f32 0.0, %v491
    %v493 = vpop.f32.mrb[0].mxu0
    %494 = vmatprep.mubr.bf16.mxu0 0
    %495 = vmatmul.mubr.bf16.gmra.mrb[0].mxu0 %v411
    %v496 = vpop.f32.mrb[0].mxu0
    %v497 = vadd.f32 0.0, %v496
    %v498 = vpop.f32.mrb[0].mxu0
    %v499 = vpop.f32.mrb[0].mxu0
    %v500 = vadd.f32 0.0, %v499
    %v501 = vpop.f32.mrb[0].mxu0
    %502 = vmatprep.mubr.bf16.mxu0 0
    %503 = vmatmul.mubr.bf16.gmra.mrb[0].mxu0 %v412
    %v504 = vpop.f32.mrb[0].mxu0
    %v505 = vadd.f32 0.0, %v504
    %v506 = vpop.f32.mrb[0].mxu0
    %v507 = vpop.f32.mrb[0].mxu0
    %v508 = vadd.f32 0.0, %v507
    %v509 = vpop.f32.mrb[0].mxu0
    %510 = vmatprep.mubr.bf16.mxu0 0
    %511 = vmatmul.mubr.bf16.gmra.mrb[0].mxu0 %v413
    %v512 = vpop.f32.mrb[0].mxu0
    %v513 = vadd.f32 0.0, %v512
    %v514 = vpop.f32.mrb[0].mxu0
    %v515 = vpop.f32.mrb[0].mxu0
    %v516 = vadd.f32 0.0, %v515
    %v517 = vpop.f32.mrb[0].mxu0
    %518 = vdwg.mxu0
    %v519 = vadd.f32 %v342, %v457
    %v520 = vadd.f32 %v343, %v460
    %v521 = vadd.f32 %v344, %v465
    %v522 = vadd.f32 %v345, %v468
    %v523 = vadd.f32 %v346, %v473
    %v524 = vadd.f32 %v347, %v476
    %v525 = vadd.f32 %v348, %v481
    %v526 = vadd.f32 %v349, %v484
    %v527 = vadd.f32 %v350, %v489
    %v528 = vadd.f32 %v351, %v492
    %v529 = vadd.f32 %v352, %v497
    %v530 = vadd.f32 %v353, %v500
    %v531 = vadd.f32 %v354, %v505
    %v532 = vadd.f32 %v355, %v508
    %v533 = vadd.f32 %v356, %v513
    %v534 = vadd.f32 %v357, %v516
    %535 = vst.msk [vmem:[#allocation3] sm:$0xff] %vm325, %v519
    %536 = vst.msk [vmem:[#allocation3 + $0x8] sm:$0xff] %vm325, %v520
    %537 = vst.msk [vmem:[#allocation3 + $0x10] sm:$0xff] %vm325, %v521
    %538 = vst.msk [vmem:[#allocation3 + $0x18] sm:$0xff] %vm325, %v522
    %539 = vst.msk [vmem:[#allocation3 + $0x20] sm:$0xff] %vm325, %v523
    %540 = vst.msk [vmem:[#allocation3 + $0x28] sm:$0xff] %vm325, %v524
    %541 = vst.msk [vmem:[#allocation3 + $0x30] sm:$0xff] %vm325, %v525
    %542 = vst.msk [vmem:[#allocation3 + $0x38] sm:$0xff] %vm325, %v526
    %543 = vst.msk [vmem:[#allocation3 + $0x40] sm:$0xff] %vm325, %v527
    %544 = vst.msk [vmem:[#allocation3 + $0x48] sm:$0xff] %vm325, %v528
    %545 = vst.msk [vmem:[#allocation3 + $0x50] sm:$0xff] %vm325, %v529
    %546 = vst.msk [vmem:[#allocation3 + $0x58] sm:$0xff] %vm325, %v530
    %547 = vst.msk [vmem:[#allocation3 + $0x60] sm:$0xff] %vm325, %v531
    %548 = vst.msk [vmem:[#allocation3 + $0x68] sm:$0xff] %vm325, %v532
    %549 = vst.msk [vmem:[#allocation3 + $0x70] sm:$0xff] %vm325, %v533
    %550 = vst.msk [vmem:[#allocation3 + $0x78] sm:$0xff] %vm325, %v534
    // Predicated region
    $region22: #{tpu_custom_call.1} parent=1 // pred_check
      %p551 = pneg %p31
    $region23: #{tpu_custom_call.1} parent=1 // pred_check_branch
      %553 = sbr.rel (%p551) target = $region25
    $region24: #{tpu_custom_call.1} parent=1 // pred_region
      %v554 = vld [vmem:[#allocation2] sm:$0xff]
      %v555 = vld [vmem:[#allocation2 + $0x8] sm:$0xff]
      %v556 = vld [vmem:[#allocation2 + $0x10] sm:$0xff]
      %v557 = vld [vmem:[#allocation2 + $0x18] sm:$0xff]
      %v558 = vld [vmem:[#allocation2 + $0x20] sm:$0xff]
      %v559 = vld [vmem:[#allocation2 + $0x28] sm:$0xff]
      %v560 = vld [vmem:[#allocation2 + $0x30] sm:$0xff]
      %v561 = vld [vmem:[#allocation2 + $0x38] sm:$0xff]
      %v562 = vld [vmem:[#allocation2 + $0x40] sm:$0xff]
      %v563 = vld [vmem:[#allocation2 + $0x48] sm:$0xff]
      %v564 = vld [vmem:[#allocation2 + $0x50] sm:$0xff]
      %v565 = vld [vmem:[#allocation2 + $0x58] sm:$0xff]
      %v566 = vld [vmem:[#allocation2 + $0x60] sm:$0xff]
      %v567 = vld [vmem:[#allocation2 + $0x68] sm:$0xff]
      %v568 = vld [vmem:[#allocation2 + $0x70] sm:$0xff]
      %v569 = vld [vmem:[#allocation2 + $0x78] sm:$0xff]
      %v570 = vpack.c.bf16 %v555, %v554
      %v571 = vpack.c.bf16 %v557, %v556
      %v572 = vpack.c.bf16 %v559, %v558
      %v573 = vpack.c.bf16 %v561, %v560
      %v574 = vpack.c.bf16 %v563, %v562
      %v575 = vpack.c.bf16 %v565, %v564
      %v576 = vpack.c.bf16 %v567, %v566
      %v577 = vpack.c.bf16 %v569, %v568
      %v586 = vunpack.c.l.b16 %v570
      %v587 = vunpack.c.h.b16 %v570
      %v588 = vunpack.c.l.b16 %v571
      %v589 = vunpack.c.h.b16 %v571
      %v590 = vunpack.c.l.b16 %v572
      %v591 = vunpack.c.h.b16 %v572
      %v592 = vunpack.c.l.b16 %v573
      %v593 = vunpack.c.h.b16 %v573
      %v594 = vunpack.c.l.b16 %v574
      %v595 = vunpack.c.h.b16 %v574
      %v596 = vunpack.c.l.b16 %v575
      %v597 = vunpack.c.h.b16 %v575
      %v598 = vunpack.c.l.b16 %v576
      %v599 = vunpack.c.h.b16 %v576
      %v600 = vunpack.c.l.b16 %v577
      %v601 = vunpack.c.h.b16 %v577
      %v602 = vpack.c.b16 %v586, %v586
      %v603 = vpack.c.b16 %v587, %v587
      %v604 = vpack.c.b16 %v588, %v588
      %v605 = vpack.c.b16 %v589, %v589
      %v606 = vpack.c.b16 %v590, %v590
      %v607 = vpack.c.b16 %v591, %v591
      %v608 = vpack.c.b16 %v592, %v592
      %v609 = vpack.c.b16 %v593, %v593
      %v610 = vpack.c.b16 %v594, %v594
      %v611 = vpack.c.b16 %v595, %v595
      %v612 = vpack.c.b16 %v596, %v596
      %v613 = vpack.c.b16 %v597, %v597
      %v614 = vpack.c.b16 %v598, %v598
      %v615 = vpack.c.b16 %v599, %v599
      %v616 = vpack.c.b16 %v600, %v600
      %v617 = vpack.c.b16 %v601, %v601
      %vm634 = vcmask 257024
      %635 = vst.msk [vmem:[%s3] sm:$0xf] %vm634, %v602
      %636 = vst.msk [vmem:[%s3 + $0x4] sm:$0xf] %vm634, %v603
      %637 = vst.msk [vmem:[%s3 + $0x8] sm:$0xf] %vm634, %v604
      %638 = vst.msk [vmem:[%s3 + $0xc] sm:$0xf] %vm634, %v605
      %639 = vst.msk [vmem:[%s3 + $0x10] sm:$0xf] %vm634, %v606
      %640 = vst.msk [vmem:[%s3 + $0x14] sm:$0xf] %vm634, %v607
      %641 = vst.msk [vmem:[%s3 + $0x18] sm:$0xf] %vm634, %v608
      %642 = vst.msk [vmem:[%s3 + $0x1c] sm:$0xf] %vm634, %v609
      %643 = vst.msk [vmem:[%s3 + $0x20] sm:$0xf] %vm634, %v610
      %644 = vst.msk [vmem:[%s3 + $0x24] sm:$0xf] %vm634, %v611
      %645 = vst.msk [vmem:[%s3 + $0x28] sm:$0xf] %vm634, %v612
      %646 = vst.msk [vmem:[%s3 + $0x2c] sm:$0xf] %vm634, %v613
      %647 = vst.msk [vmem:[%s3 + $0x30] sm:$0xf] %vm634, %v614
      %648 = vst.msk [vmem:[%s3 + $0x34] sm:$0xf] %vm634, %v615
      %649 = vst.msk [vmem:[%s3 + $0x38] sm:$0xf] %vm634, %v616
      %650 = vst.msk [vmem:[%s3 + $0x3c] sm:$0xf] %vm634, %v617
      %v651 = vld [vmem:[#allocation3] sm:$0xff]
      %v652 = vld [vmem:[#allocation3 + $0x8] sm:$0xff]
      %v653 = vld [vmem:[#allocation3 + $0x10] sm:$0xff]
      %v654 = vld [vmem:[#allocation3 + $0x18] sm:$0xff]
      %v655 = vld [vmem:[#allocation3 + $0x20] sm:$0xff]
      %v656 = vld [vmem:[#allocation3 + $0x28] sm:$0xff]
      %v657 = vld [vmem:[#allocation3 + $0x30] sm:$0xff]
      %v658 = vld [vmem:[#allocation3 + $0x38] sm:$0xff]
      %v659 = vld [vmem:[#allocation3 + $0x40] sm:$0xff]
      %v660 = vld [vmem:[#allocation3 + $0x48] sm:$0xff]
      %v661 = vld [vmem:[#allocation3 + $0x50] sm:$0xff]
      %v662 = vld [vmem:[#allocation3 + $0x58] sm:$0xff]
      %v663 = vld [vmem:[#allocation3 + $0x60] sm:$0xff]
      %v664 = vld [vmem:[#allocation3 + $0x68] sm:$0xff]
      %v665 = vld [vmem:[#allocation3 + $0x70] sm:$0xff]
      %v666 = vld [vmem:[#allocation3 + $0x78] sm:$0xff]
      %v667 = vpack.c.bf16 %v652, %v651
      %v668 = vpack.c.bf16 %v654, %v653
      %v669 = vpack.c.bf16 %v656, %v655
      %v670 = vpack.c.bf16 %v658, %v657
      %v671 = vpack.c.bf16 %v660, %v659
      %v672 = vpack.c.bf16 %v662, %v661
      %v673 = vpack.c.bf16 %v664, %v663
      %v674 = vpack.c.bf16 %v666, %v665
      %v683 = vunpack.c.l.b16 %v667
      %v684 = vunpack.c.h.b16 %v667
      %v685 = vunpack.c.l.b16 %v668
      %v686 = vunpack.c.h.b16 %v668
      %v687 = vunpack.c.l.b16 %v669
      %v688 = vunpack.c.h.b16 %v669
      %v689 = vunpack.c.l.b16 %v670
      %v690 = vunpack.c.h.b16 %v670
      %v691 = vunpack.c.l.b16 %v671
      %v692 = vunpack.c.h.b16 %v671
      %v693 = vunpack.c.l.b16 %v672
      %v694 = vunpack.c.h.b16 %v672
      %v695 = vunpack.c.l.b16 %v673
      %v696 = vunpack.c.h.b16 %v673
      %v697 = vunpack.c.l.b16 %v674
      %v698 = vunpack.c.h.b16 %v674
      %v699 = vpack.c.b16 %v683, %v683
      %v700 = vpack.c.b16 %v684, %v684
      %v701 = vpack.c.b16 %v685, %v685
      %v702 = vpack.c.b16 %v686, %v686
      %v703 = vpack.c.b16 %v687, %v687
      %v704 = vpack.c.b16 %v688, %v688
      %v705 = vpack.c.b16 %v689, %v689
      %v706 = vpack.c.b16 %v690, %v690
      %v707 = vpack.c.b16 %v691, %v691
      %v708 = vpack.c.b16 %v692, %v692
      %v709 = vpack.c.b16 %v693, %v693
      %v710 = vpack.c.b16 %v694, %v694
      %v711 = vpack.c.b16 %v695, %v695
      %v712 = vpack.c.b16 %v696, %v696
      %v713 = vpack.c.b16 %v697, %v697
      %v714 = vpack.c.b16 %v698, %v698
      %731 = vst.msk [vmem:[%s4] sm:$0xf] %vm634, %v699
      %732 = vst.msk [vmem:[%s4 + $0x4] sm:$0xf] %vm634, %v700
      %733 = vst.msk [vmem:[%s4 + $0x8] sm:$0xf] %vm634, %v701
      %734 = vst.msk [vmem:[%s4 + $0xc] sm:$0xf] %vm634, %v702
      %735 = vst.msk [vmem:[%s4 + $0x10] sm:$0xf] %vm634, %v703
      %736 = vst.msk [vmem:[%s4 + $0x14] sm:$0xf] %vm634, %v704
      %737 = vst.msk [vmem:[%s4 + $0x18] sm:$0xf] %vm634, %v705
      %738 = vst.msk [vmem:[%s4 + $0x1c] sm:$0xf] %vm634, %v706
      %739 = vst.msk [vmem:[%s4 + $0x20] sm:$0xf] %vm634, %v707
      %740 = vst.msk [vmem:[%s4 + $0x24] sm:$0xf] %vm634, %v708
      %741 = vst.msk [vmem:[%s4 + $0x28] sm:$0xf] %vm634, %v709
      %742 = vst.msk [vmem:[%s4 + $0x2c] sm:$0xf] %vm634, %v710
      %743 = vst.msk [vmem:[%s4 + $0x30] sm:$0xf] %vm634, %v711
      %744 = vst.msk [vmem:[%s4 + $0x34] sm:$0xf] %vm634, %v712
      %745 = vst.msk [vmem:[%s4 + $0x38] sm:$0xf] %vm634, %v713
      %746 = vst.msk [vmem:[%s4 + $0x3c] sm:$0xf] %vm634, %v714
    $region25: #{tpu_custom_call.1} parent=1 // pred_fallthru
      _
    // Predicated region
    $region26: #{tpu_custom_call.1} parent=1 // pred_check
      _
    $region27: #{tpu_custom_call.1} parent=1 // pred_check_branch
      %748 = sbr.rel (0) target = $region29
    $region28: #{tpu_custom_call.1} parent=1 // pred_region
      _
    $region29: #{tpu_custom_call.1} parent=1 // pred_fallthru
      _
    // Predicated region
    $region30: #{tpu_custom_call.1} parent=1 // pred_check
      _
    $region31: #{tpu_custom_call.1} parent=1 // pred_check_branch
      %750 = sbr.rel (0) target = $region33
    $region32: #{tpu_custom_call.1} parent=1 // pred_region
      _
    $region33: #{tpu_custom_call.1} parent=1 // pred_fallthru
      _
    // Predicated region
    $region34: #{tpu_custom_call.1} parent=1 // pred_check
      _
    $region35: #{tpu_custom_call.1} parent=1 // pred_check_branch
      %752 = sbr.rel (0) target = $region37
    $region36: #{tpu_custom_call.1} parent=1 // pred_region
      _
    $region37: #{tpu_custom_call.1} parent=1 // pred_fallthru
      _
    // Predicated region
    $region38: #{tpu_custom_call.1} parent=1 // pred_check
      _
    $region39: #{tpu_custom_call.1} parent=1 // pred_check_branch
      %754 = sbr.rel (0) target = $region41
    $region40: #{tpu_custom_call.1} parent=1 // pred_region
      _
    $region41: #{tpu_custom_call.1} parent=1 // pred_fallthru
      _
    %755 = vsyncpa [#allocation5], 1

</llo_original>
